<compile_context>
chip_gen: v7x
topology: tpu7x:2x2x1
jax: 0.10.0
libtpu: 0.0.40
codegen_flags: <defaults>
</compile_context>

<pallas_src>
import functools
import math

import jax
import jax.numpy as jnp
from jax import lax
from jax.experimental import pallas as pl
from jax.experimental.pallas import tpu as pltpu  # noqa: F401  (TPU backend assumed)

HEADS = 5  # QValueNet builds SelfAttention(state_dim, heads=5)


# ---------------------------------------------------------------------------
# Fused kernel: SelfAttention (Lq = Lk = 1, no mask) + fc_out + MLP head
# All weight refs are pre-transposed to (in_features, out_features).
# ---------------------------------------------------------------------------
def _qvaluenet_kernel(x_ref, seg_ref,
                      wq_ref, wk_ref, wv_ref, wo_ref, bo_ref,
                      w1_ref, b1_ref, w2_ref, b2_ref, w3_ref, b3_ref,
                      o_ref, *, scale):
    f32 = jnp.float32
    x = x_ref[...]                                                       # (B, S)

    # ---- SelfAttention projections (bias-free Linears) ----------------------
    q = jnp.dot(x, wq_ref[...], preferred_element_type=f32)              # (B, S)
    k = jnp.dot(x, wk_ref[...], preferred_element_type=f32)              # (B, S)
    v = jnp.dot(x, wv_ref[...], preferred_element_type=f32)              # (B, S)

    # ---- attention core ------------------------------------------------------
    # seg[s, h] = 1.0 iff feature lane s belongs to head h  (S = H * head_dim)
    seg = seg_ref[...]                                                   # (S, H)
    # energy[b, h] = sum_d q[b, h, d] * k[b, h, d]   ('nqhd,nkhd->nhqk', Lq = Lk = 1)
    energy = jnp.dot(q * k, seg, preferred_element_type=f32)             # (B, H)
    logits = energy * scale
    # softmax over the key axis: Lk == 1, so row-max == logits and the
    # normalized attention weight is exactly 1.0 for any finite energy.
    p = jnp.exp(logits - logits)                                         # (B, H) == 1.0
    attn = p * pl.reciprocal(p, approx=False)                            # p / sum_over_keys(p)
    # broadcast the per-head attention weight back across that head's lanes
    attn_full = lax.dot_general(attn, seg, (((1,), (1,)), ((), ())),
                                preferred_element_type=f32)              # (B, S)
    attn_out = attn_full * v                                             # == v exactly (Lk == 1)

    # fc_out (Linear with bias)
    y = jnp.dot(attn_out, wo_ref[...], preferred_element_type=f32) + bo_ref[...]

    # ---- MLP head: relu(fc1) -> relu(fc2) -> fc3 -----------------------------
    h1 = jnp.maximum(jnp.dot(y, w1_ref[...], preferred_element_type=f32) + b1_ref[...], 0.0)
    h2 = jnp.maximum(jnp.dot(h1, w2_ref[...], preferred_element_type=f32) + b2_ref[...], 0.0)
    o_ref[...] = jnp.dot(h2, w3_ref[...], preferred_element_type=f32) + b3_ref[...]


# ---------------------------------------------------------------------------
# Wrapper: one pallas_call, whole-array VMEM blocks (no grid / no BlockSpecs).
# Accepts PyTorch-layout params ((out, in) weights, (out,) biases) and presents
# (in, out) weights / (1, out) biases to the kernel so every matmul is (M,K)@(K,N).
# ---------------------------------------------------------------------------
def qvaluenet_forward(x, params):
    B, S = x.shape
    A = params["W3"].shape[0]
    D = S // HEADS
    # head-segment one-hot (constant, built once outside the kernel)
    seg = (jnp.arange(S)[:, None] // D == jnp.arange(HEADS)[None, :]).astype(jnp.float32)

    kernel = functools.partial(_qvaluenet_kernel, scale=1.0 / math.sqrt(float(S)))
    return pl.pallas_call(
        kernel,
        out_shape=jax.ShapeDtypeStruct((B, A), jnp.float32),
    )(x, seg,
      params["Wq"].T, params["Wk"].T, params["Wv"].T,
      params["Wo"].T, params["bo"].reshape(1, S),
      params["W1"].T, params["b1"].reshape(1, -1),
      params["W2"].T, params["b2"].reshape(1, -1),
      params["W3"].T, params["b3"].reshape(1, -1))


# ---------------------------------------------------------------------------
# Pure-JAX replica of the PyTorch QValueNet forward (for validation)
# ---------------------------------------------------------------------------
def reference_forward(x, params):
    N, S = x.shape
    H, D = HEADS, S // HEADS
    xq = x[:, None, :]                                            # unsqueeze(1) -> (N, 1, S)
    v = (xq @ params["Wv"].T).reshape(N, -1, H, D)
    k = (xq @ params["Wk"].T).reshape(N, -1, H, D)
    q = (xq @ params["Wq"].T).reshape(N, -1, H, D)
    energy = jnp.einsum("nqhd,nkhd->nhqk", q, k)                  # mask is None
    attn = jax.nn.softmax(energy / math.sqrt(S), axis=3)
    out = jnp.einsum("nhql,nlhd->nqhd", attn, v).reshape(N, -1, H * D)
    out = (out @ params["Wo"].T + params["bo"])[:, 0, :]          # fc_out, squeeze(1)
    h1 = jax.nn.relu(out @ params["W1"].T + params["b1"])
    h2 = jax.nn.relu(h1 @ params["W2"].T + params["b2"])
    return h2 @ params["W3"].T + params["b3"]


# ---------------------------------------------------------------------------
if __name__ == "__main__":
    STATE_DIM = 25      # divisible by HEADS=5 (e.g. highway-env: 5 vehicles x 5 features)
    ACTION_DIM = 5
    HIDDEN_1, HIDDEN_2 = 128, 256
    B = 2

    key = jax.random.PRNGKey(0)
    ks = jax.random.split(key, 12)

    def _lin_w(k, out_f, in_f):
        bound = 1.0 / math.sqrt(in_f)
        return jax.random.uniform(k, (out_f, in_f), jnp.float32, -bound, bound)

    def _lin_b(k, out_f, in_f):
        bound = 1.0 / math.sqrt(in_f)
        return jax.random.uniform(k, (out_f,), jnp.float32, -bound, bound)

    params = {
        "Wv": _lin_w(ks[0], STATE_DIM, STATE_DIM),
        "Wk": _lin_w(ks[1], STATE_DIM, STATE_DIM),
        "Wq": _lin_w(ks[2], STATE_DIM, STATE_DIM),
        "Wo": _lin_w(ks[3], STATE_DIM, STATE_DIM),
        "bo": _lin_b(ks[4], STATE_DIM, STATE_DIM),
        "W1": _lin_w(ks[5], HIDDEN_1, STATE_DIM),
        "b1": _lin_b(ks[6], HIDDEN_1, STATE_DIM),
        "W2": _lin_w(ks[7], HIDDEN_2, HIDDEN_1),
        "b2": _lin_b(ks[8], HIDDEN_2, HIDDEN_1),
        "W3": _lin_w(ks[9], ACTION_DIM, HIDDEN_2),
        "b3": _lin_b(ks[10], ACTION_DIM, HIDDEN_2),
    }

    x = jax.random.normal(ks[11], (B, STATE_DIM), jnp.float32)

    out = qvaluenet_forward(x, params)
    out = jax.block_until_ready(out)

    ref = reference_forward(x, params)
    assert out.shape == (B, ACTION_DIM)
    assert jnp.allclose(out, ref, atol=2e-4, rtol=2e-4), "mismatch vs reference"

    print("KERNEL_OK")
</pallas_src>

<mosaic_0001>
module attributes {stable_mosaic.version = 11 : i64} {
  func.func @_qvaluenet_kernel(%arg0: memref<2x25xf32, #tpu.memory_space<vmem>>, %arg1: memref<25x5xf32, #tpu.memory_space<vmem>>, %arg2: memref<25x25xf32, #tpu.memory_space<vmem>>, %arg3: memref<25x25xf32, #tpu.memory_space<vmem>>, %arg4: memref<25x25xf32, #tpu.memory_space<vmem>>, %arg5: memref<25x25xf32, #tpu.memory_space<vmem>>, %arg6: memref<1x25xf32, #tpu.memory_space<vmem>>, %arg7: memref<25x128xf32, #tpu.memory_space<vmem>>, %arg8: memref<1x128xf32, #tpu.memory_space<vmem>>, %arg9: memref<128x256xf32, #tpu.memory_space<vmem>>, %arg10: memref<1x256xf32, #tpu.memory_space<vmem>>, %arg11: memref<256x5xf32, #tpu.memory_space<vmem>>, %arg12: memref<1x5xf32, #tpu.memory_space<vmem>>, %arg13: memref<2x5xf32, #tpu.memory_space<vmem>>) attributes {dimension_semantics = [], scalar_prefetch = 0 : i64, scratch_operands = 0 : i64, tpu.core_type = #tpu.core_type<tc>} {
    %c0 = arith.constant 0 : index
    %c0_0 = arith.constant 0 : index
    %0 = vector.load %arg0[%c0, %c0_0] : memref<2x25xf32, #tpu.memory_space<vmem>>, vector<2x25xf32>
    %c0_1 = arith.constant 0 : index
    %c0_2 = arith.constant 0 : index
    %1 = vector.load %arg2[%c0_1, %c0_2] : memref<25x25xf32, #tpu.memory_space<vmem>>, vector<25x25xf32>
    %cst = arith.constant dense<0.000000e+00> : vector<2x25xf32>
    %2 = tpu.matmul %0, %1, %cst {dimension_numbers = #tpu.dot_dimension_numbers<[1], [0], [0], [1], [0, 0, 1, 1], [], []>} : vector<2x25xf32>, vector<25x25xf32>, vector<2x25xf32> -> vector<2x25xf32>
    %c0_3 = arith.constant 0 : index
    %c0_4 = arith.constant 0 : index
    %3 = vector.load %arg3[%c0_3, %c0_4] : memref<25x25xf32, #tpu.memory_space<vmem>>, vector<25x25xf32>
    %cst_5 = arith.constant dense<0.000000e+00> : vector<2x25xf32>
    %4 = tpu.matmul %0, %3, %cst_5 {dimension_numbers = #tpu.dot_dimension_numbers<[1], [0], [0], [1], [0, 0, 1, 1], [], []>} : vector<2x25xf32>, vector<25x25xf32>, vector<2x25xf32> -> vector<2x25xf32>
    %c0_6 = arith.constant 0 : index
    %c0_7 = arith.constant 0 : index
    %5 = vector.load %arg4[%c0_6, %c0_7] : memref<25x25xf32, #tpu.memory_space<vmem>>, vector<25x25xf32>
    %cst_8 = arith.constant dense<0.000000e+00> : vector<2x25xf32>
    %6 = tpu.matmul %0, %5, %cst_8 {dimension_numbers = #tpu.dot_dimension_numbers<[1], [0], [0], [1], [0, 0, 1, 1], [], []>} : vector<2x25xf32>, vector<25x25xf32>, vector<2x25xf32> -> vector<2x25xf32>
    %c0_9 = arith.constant 0 : index
    %c0_10 = arith.constant 0 : index
    %7 = vector.load %arg1[%c0_9, %c0_10] : memref<25x5xf32, #tpu.memory_space<vmem>>, vector<25x5xf32>
    %8 = arith.mulf %2, %4 : vector<2x25xf32>
    %cst_11 = arith.constant dense<0.000000e+00> : vector<2x5xf32>
    %9 = tpu.matmul %8, %7, %cst_11 {dimension_numbers = #tpu.dot_dimension_numbers<[1], [0], [0], [1], [0, 0, 1, 1], [], []>} : vector<2x25xf32>, vector<25x5xf32>, vector<2x5xf32> -> vector<2x5xf32>
    %cst_12 = arith.constant 2.000000e-01 : f32
    %10 = vector.broadcast %cst_12 : f32 to vector<2x5xf32>
    %11 = arith.mulf %9, %10 : vector<2x5xf32>
    %12 = arith.subf %11, %11 : vector<2x5xf32>
    %13 = math.exp %12 : vector<2x5xf32>
    %14 = tpu.reciprocal %13 : vector<2x5xf32> -> vector<2x5xf32>
    %15 = arith.mulf %13, %14 : vector<2x5xf32>
    %cst_13 = arith.constant dense<0.000000e+00> : vector<2x25xf32>
    %16 = tpu.matmul %15, %7, %cst_13 {dimension_numbers = #tpu.dot_dimension_numbers<[1], [1], [0], [0], [0, 0, 1, 0], [], []>} : vector<2x5xf32>, vector<25x5xf32>, vector<2x25xf32> -> vector<2x25xf32>
    %17 = arith.mulf %16, %6 : vector<2x25xf32>
    %c0_14 = arith.constant 0 : index
    %c0_15 = arith.constant 0 : index
    %18 = vector.load %arg5[%c0_14, %c0_15] : memref<25x25xf32, #tpu.memory_space<vmem>>, vector<25x25xf32>
    %cst_16 = arith.constant dense<0.000000e+00> : vector<2x25xf32>
    %19 = tpu.matmul %17, %18, %cst_16 {dimension_numbers = #tpu.dot_dimension_numbers<[1], [0], [0], [1], [0, 0, 1, 1], [], []>} : vector<2x25xf32>, vector<25x25xf32>, vector<2x25xf32> -> vector<2x25xf32>
    %c0_17 = arith.constant 0 : index
    %c0_18 = arith.constant 0 : index
    %20 = vector.load %arg6[%c0_17, %c0_18] : memref<1x25xf32, #tpu.memory_space<vmem>>, vector<1x25xf32>
    %21 = vector.broadcast %20 : vector<1x25xf32> to vector<2x25xf32>
    %22 = arith.addf %19, %21 : vector<2x25xf32>
    %c0_19 = arith.constant 0 : index
    %c0_20 = arith.constant 0 : index
    %23 = vector.load %arg7[%c0_19, %c0_20] : memref<25x128xf32, #tpu.memory_space<vmem>>, vector<25x128xf32>
    %cst_21 = arith.constant dense<0.000000e+00> : vector<2x128xf32>
    %24 = tpu.matmul %22, %23, %cst_21 {dimension_numbers = #tpu.dot_dimension_numbers<[1], [0], [0], [1], [0, 0, 1, 1], [], []>} : vector<2x25xf32>, vector<25x128xf32>, vector<2x128xf32> -> vector<2x128xf32>
    %c0_22 = arith.constant 0 : index
    %c0_23 = arith.constant 0 : index
    %25 = vector.load %arg8[%c0_22, %c0_23] : memref<1x128xf32, #tpu.memory_space<vmem>>, vector<1x128xf32>
    %26 = vector.broadcast %25 : vector<1x128xf32> to vector<2x128xf32>
    %27 = arith.addf %24, %26 : vector<2x128xf32>
    %cst_24 = arith.constant 0.000000e+00 : f32
    %28 = vector.broadcast %cst_24 : f32 to vector<2x128xf32>
    %29 = arith.maximumf %27, %28 : vector<2x128xf32>
    %c0_25 = arith.constant 0 : index
    %c0_26 = arith.constant 0 : index
    %30 = vector.load %arg9[%c0_25, %c0_26] : memref<128x256xf32, #tpu.memory_space<vmem>>, vector<128x256xf32>
    %cst_27 = arith.constant dense<0.000000e+00> : vector<2x256xf32>
    %31 = tpu.matmul %29, %30, %cst_27 {dimension_numbers = #tpu.dot_dimension_numbers<[1], [0], [0], [1], [0, 0, 1, 1], [], []>} : vector<2x128xf32>, vector<128x256xf32>, vector<2x256xf32> -> vector<2x256xf32>
    %c0_28 = arith.constant 0 : index
    %c0_29 = arith.constant 0 : index
    %32 = vector.load %arg10[%c0_28, %c0_29] : memref<1x256xf32, #tpu.memory_space<vmem>>, vector<1x256xf32>
    %33 = vector.broadcast %32 : vector<1x256xf32> to vector<2x256xf32>
    %34 = arith.addf %31, %33 : vector<2x256xf32>
    %cst_30 = arith.constant 0.000000e+00 : f32
    %35 = vector.broadcast %cst_30 : f32 to vector<2x256xf32>
    %36 = arith.maximumf %34, %35 : vector<2x256xf32>
    %c0_31 = arith.constant 0 : index
    %c0_32 = arith.constant 0 : index
    %37 = vector.load %arg11[%c0_31, %c0_32] : memref<256x5xf32, #tpu.memory_space<vmem>>, vector<256x5xf32>
    %cst_33 = arith.constant dense<0.000000e+00> : vector<2x5xf32>
    %38 = tpu.matmul %36, %37, %cst_33 {dimension_numbers = #tpu.dot_dimension_numbers<[1], [0], [0], [1], [0, 0, 1, 1], [], []>} : vector<2x256xf32>, vector<256x5xf32>, vector<2x5xf32> -> vector<2x5xf32>
    %c0_34 = arith.constant 0 : index
    %c0_35 = arith.constant 0 : index
    %39 = vector.load %arg12[%c0_34, %c0_35] : memref<1x5xf32, #tpu.memory_space<vmem>>, vector<1x5xf32>
    %40 = vector.broadcast %39 : vector<1x5xf32> to vector<2x5xf32>
    %41 = arith.addf %38, %40 : vector<2x5xf32>
    %c0_36 = arith.constant 0 : index
    %c0_37 = arith.constant 0 : index
    %42 = vector.load %arg13[%c0_36, %c0_37] : memref<2x5xf32, #tpu.memory_space<vmem>>, vector<2x5xf32>
    tpu.vector_store %arg13[%c0_36, %c0_37], %41 {strides = array<i32>} : memref<2x5xf32, #tpu.memory_space<vmem>>, vector<2x5xf32>,
    return
  }
}

</mosaic_0001>

<llo_original>
// kernel: tpu_custom_call.1
$region0: #{tpu_custom_call.1}
  #allocation0 [shape = 'u32[]', space=smem, size = 0x4, offset = 0x4, fixed_abs, tag = 'smem constant byte address 0x4 - core index']
  #allocation1 [shape = 'u32[144,128]{1,0:T(1,128)}', space=vmem, size = 0x12000, scoped, tag = 'internal scratch']
  %s0 = inlined_call_operand.vmem [shape: f32[2,25], index: 0, kind: input, shape index: {}]
  %s1 = inlined_call_operand.vmem [shape: f32[25,5], index: 1, kind: input, shape index: {}]
  %s2 = inlined_call_operand.vmem [shape: f32[25,25], index: 2, kind: input, shape index: {}]
  %s3 = inlined_call_operand.vmem [shape: f32[25,25], index: 3, kind: input, shape index: {}]
  %s4 = inlined_call_operand.hbm [shape: f32[25,25], index: 4, kind: input, shape index: {}]
  %s5 = inlined_call_operand.hbm [shape: f32[25,25], index: 5, kind: input, shape index: {}]
  %s6 = inlined_call_operand.vmem [shape: f32[1,25], index: 6, kind: input, shape index: {}]
  %s7 = inlined_call_operand.hbm [shape: f32[25,128], index: 7, kind: input, shape index: {}]
  %s8 = inlined_call_operand.vmem [shape: f32[1,128], index: 8, kind: input, shape index: {}]
  %s9 = inlined_call_operand.vmem [shape: f32[128,256], index: 9, kind: input, shape index: {}]
  %s10 = inlined_call_operand.vmem [shape: f32[1,256], index: 10, kind: input, shape index: {}]
  %s11 = inlined_call_operand.vmem [shape: f32[256,5], index: 11, kind: input, shape index: {}]
  %s12 = inlined_call_operand.vmem [shape: f32[1,5], index: 12, kind: input, shape index: {}]
  %s13 = inlined_call_operand.hbm [shape: f32[2,5], index: 13, kind: output, shape index: {}]
  %s14 = sld [smem:[#allocation0]]
  $region74: #{tpu_custom_call.1} parent=0
    _
  %s16 = ssub.s32 1, %s14
  %s17 = scalar_select 0, %s16, %s14
  $region1: #{tpu_custom_call.1} parent=0
    #allocation2 [shape = 'u8[16384]{0}', space=vmem, size = 0x4000, scoped, tag = 'input window, operand 4, single buffered']
    #allocation3 [shape = 's32[1]{0}', space=sflag, size = 0x4, scoped, tag = 'scoped memory for tpu_custom_call.1']
    #allocation4 [shape = 's32[1]{0}', space=sflag, size = 0x4, scoped, tag = 'scoped memory for tpu_custom_call.1']
    #allocation5 [shape = 'u8[16384]{0}', space=vmem, size = 0x4000, scoped, tag = 'input window, operand 5, single buffered']
    #allocation6 [shape = 's32[1]{0}', space=sflag, size = 0x4, scoped, tag = 'scoped memory for tpu_custom_call.1']
    #allocation7 [shape = 'u8[16384]{0}', space=vmem, size = 0x4000, scoped, tag = 'input window, operand 7, single buffered']
    #allocation8 [shape = 'u8[1024]{0}', space=vmem, size = 0x400, scoped, tag = 'output window, operand 0, single buffered']
    %18 = vsyncpa [#allocation3], 0
    %19 = vsyncpa [#allocation6], 0
    %20 = vsyncpa [#allocation4], 0
    // Predicated region
    $region2: #{tpu_custom_call.1} parent=1 // pred_check
      _
    $region3: #{tpu_custom_call.1} parent=1 // pred_check_branch
      %22 = sbr.rel (0) target = $region5
    $region4: #{tpu_custom_call.1} parent=1 // pred_region
      _
    $region5: #{tpu_custom_call.1} parent=1 // pred_fallthru
      _
    // Predicated region
    $region6: #{tpu_custom_call.1} parent=1 // pred_check
      _
    $region7: #{tpu_custom_call.1} parent=1 // pred_check_branch
      %24 = sbr.rel (0) target = $region9
    $region8: #{tpu_custom_call.1} parent=1 // pred_region
      _
    $region9: #{tpu_custom_call.1} parent=1 // pred_fallthru
      _
    // Predicated region
    $region10: #{tpu_custom_call.1} parent=1 // pred_check
      _
    $region11: #{tpu_custom_call.1} parent=1 // pred_check_branch
      %26 = sbr.rel (0) target = $region13
    $region12: #{tpu_custom_call.1} parent=1 // pred_region
      _
    $region13: #{tpu_custom_call.1} parent=1 // pred_fallthru
      _
    // Predicated region
    $region14: #{tpu_custom_call.1} parent=1 // pred_check
      _
    $region15: #{tpu_custom_call.1} parent=1 // pred_check_branch
      %28 = sbr.rel (0) target = $region17
    $region16: #{tpu_custom_call.1} parent=1 // pred_region
      _
    $region17: #{tpu_custom_call.1} parent=1 // pred_fallthru
      _
    // Predicated region
    $region18: #{tpu_custom_call.1} parent=1 // pred_check
      _
    $region19: #{tpu_custom_call.1} parent=1 // pred_check_branch
      %30 = sbr.rel (0) target = $region21
    $region20: #{tpu_custom_call.1} parent=1 // pred_region
      %s32 = ssub.s32 512, 512
      %33 = vsyncadd [#allocation3], %s32
      %s34 = sshll.u32 [#allocation2], 4
      %s35 = int_to_ptr.vmem [resolvable:$true] %s34
      %40 = dma.hbm_to_vmem [thread:$0]  %s4, 512, %s35, [#allocation3], 128, 128, 8
    $region21: #{tpu_custom_call.1} parent=1 // pred_fallthru
      _
    // Predicated region
    $region22: #{tpu_custom_call.1} parent=1 // pred_check
      _
    $region23: #{tpu_custom_call.1} parent=1 // pred_check_branch
      %42 = sbr.rel (0) target = $region25
    $region24: #{tpu_custom_call.1} parent=1 // pred_region
      %s44 = ssub.s32 512, 512
      %45 = vsyncadd [#allocation6], %s44
      %s46 = sshll.u32 [#allocation5], 4
      %s47 = int_to_ptr.vmem [resolvable:$true] %s46
      %52 = dma.hbm_to_vmem [thread:$0]  %s5, 512, %s47, [#allocation6], 128, 128, 8
    $region25: #{tpu_custom_call.1} parent=1 // pred_fallthru
      _
    // Predicated region
    $region26: #{tpu_custom_call.1} parent=1 // pred_check
      _
    $region27: #{tpu_custom_call.1} parent=1 // pred_check_branch
      %54 = sbr.rel (0) target = $region29
    $region28: #{tpu_custom_call.1} parent=1 // pred_region
      _
    $region29: #{tpu_custom_call.1} parent=1 // pred_fallthru
      _
    // Predicated region
    $region30: #{tpu_custom_call.1} parent=1 // pred_check
      _
    $region31: #{tpu_custom_call.1} parent=1 // pred_check_branch
      %56 = sbr.rel (0) target = $region33
    $region32: #{tpu_custom_call.1} parent=1 // pred_region
      %s58 = ssub.s32 512, 512
      %59 = vsyncadd [#allocation6], %s58
      %s60 = sshll.u32 [#allocation7], 4
      %s61 = int_to_ptr.vmem [resolvable:$true] %s60
      %66 = dma.hbm_to_vmem [thread:$0]  %s7, 512, %s61, [#allocation6], 128, 128, 8
    $region33: #{tpu_custom_call.1} parent=1 // pred_fallthru
      _
    // Predicated region
    $region34: #{tpu_custom_call.1} parent=1 // pred_check
      _
    $region35: #{tpu_custom_call.1} parent=1 // pred_check_branch
      %68 = sbr.rel (0) target = $region37
    $region36: #{tpu_custom_call.1} parent=1 // pred_region
      _
    $region37: #{tpu_custom_call.1} parent=1 // pred_fallthru
      _
    // Predicated region
    $region38: #{tpu_custom_call.1} parent=1 // pred_check
      _
    $region39: #{tpu_custom_call.1} parent=1 // pred_check_branch
      %70 = sbr.rel (0) target = $region41
    $region40: #{tpu_custom_call.1} parent=1 // pred_region
      _
    $region41: #{tpu_custom_call.1} parent=1 // pred_fallthru
      _
    // Predicated region
    $region42: #{tpu_custom_call.1} parent=1 // pred_check
      _
    $region43: #{tpu_custom_call.1} parent=1 // pred_check_branch
      %72 = sbr.rel (0) target = $region45
    $region44: #{tpu_custom_call.1} parent=1 // pred_region
      _
    $region45: #{tpu_custom_call.1} parent=1 // pred_fallthru
      _
    // Predicated region
    $region46: #{tpu_custom_call.1} parent=1 // pred_check
      _
    $region47: #{tpu_custom_call.1} parent=1 // pred_check_branch
      %74 = sbr.rel (0) target = $region49
    $region48: #{tpu_custom_call.1} parent=1 // pred_region
      _
    $region49: #{tpu_custom_call.1} parent=1 // pred_fallthru
      _
    // Predicated region
    $region50: #{tpu_custom_call.1} parent=1 // pred_check
      _
    $region51: #{tpu_custom_call.1} parent=1 // pred_check_branch
      %76 = sbr.rel (0) target = $region53
    $region52: #{tpu_custom_call.1} parent=1 // pred_region
      _
    $region53: #{tpu_custom_call.1} parent=1 // pred_fallthru
      _
    // Predicated region
    $region54: #{tpu_custom_call.1} parent=1 // pred_check
      _
    $region55: #{tpu_custom_call.1} parent=1 // pred_check_branch
      %78 = sbr.rel (0) target = $region57
    $region56: #{tpu_custom_call.1} parent=1 // pred_region
      %79 = dma.done [#allocation3], 512
    $region57: #{tpu_custom_call.1} parent=1 // pred_fallthru
      _
    // Predicated region
    $region58: #{tpu_custom_call.1} parent=1 // pred_check
      _
    $region59: #{tpu_custom_call.1} parent=1 // pred_check_branch
      %81 = sbr.rel (0) target = $region61
    $region60: #{tpu_custom_call.1} parent=1 // pred_region
      %82 = dma.done [#allocation6], 512
    $region61: #{tpu_custom_call.1} parent=1 // pred_fallthru
      _
    // Predicated region
    $region62: #{tpu_custom_call.1} parent=1 // pred_check
      _
    $region63: #{tpu_custom_call.1} parent=1 // pred_check_branch
      %84 = sbr.rel (0) target = $region65
    $region64: #{tpu_custom_call.1} parent=1 // pred_region
      %85 = dma.done [#allocation6], 512
    $region65: #{tpu_custom_call.1} parent=1 // pred_fallthru
      _
    %v86 = vld [vmem:[%s0] sm:$0x3]
    %v87 = vld [vmem:[%s2] sm:$0xff]
    %v88 = vld [vmem:[%s2 + $0x8] sm:$0xff]
    %v89 = vld [vmem:[%s2 + $0x10] sm:$0xff]
    %v90 = vld [vmem:[%s2 + $0x18] sm:$0x1]
    %vm91 = vcmask 203776
    %v93 = vsel %vm91, %v86, 0
    %vm95 = vcmask 1040384
    %v97 = vsel %vm95, %v90, 0
    %99 = vmatprep.subr.mxu0 0.0
    %100 = vmatpush1.msra.mxu0 %v87
    %101 = vmatprep.subr.mxu0 0.0
    %102 = vmatpush1.msra.mxu0 %v88
    %103 = vmatprep.subr.mxu0 0.0
    %104 = vmatpush1.msra.mxu0 %v89
    %105 = vmatprep.subr.mxu0 0.0
    %106 = vmatpush1.msra.mxu0 %v97
    %107 = vmatprep.subr.mxu0 0.0
    %108 = vmatpush1.msra.mxu0 0.0
    %109 = vmatprep.subr.mxu0 0.0
    %110 = vmatpush1.msra.mxu0 0.0
    %111 = vmatprep.subr.mxu0 0.0
    %112 = vmatpush1.msra.mxu0 0.0
    %113 = vmatprep.subr.mxu0 0.0
    %114 = vmatpush1.msra.mxu0 0.0
    %115 = vmatprep.subr.mxu0 0.0
    %116 = vmatpush1.msra.mxu0 0.0
    %117 = vmatprep.subr.mxu0 0.0
    %118 = vmatpush1.msra.mxu0 0.0
    %119 = vmatprep.subr.mxu0 0.0
    %120 = vmatpush1.msra.mxu0 0.0
    %121 = vmatprep.subr.mxu0 0.0
    %122 = vmatpush1.msra.mxu0 0.0
    %123 = vmatprep.subr.mxu0 0.0
    %124 = vmatpush1.msra.mxu0 0.0
    %125 = vmatprep.subr.mxu0 0.0
    %126 = vmatpush1.msra.mxu0 0.0
    %127 = vmatprep.subr.mxu0 0.0
    %128 = vmatpush1.msra.mxu0 0.0
    %129 = vmatprep.subr.mxu0 0.0
    %130 = vmatpush1.msra.mxu0 0.0
    %131 = vmatprep.subr.mxu0 0.0
    %132 = vmatpush1.msra.mxu0 0.0
    %133 = vmatprep.subr.mxu0 0.0
    %134 = vmatpush1.msra.mxu0 0.0
    %135 = vmatprep.subr.mxu0 0.0
    %136 = vmatpush1.msra.mxu0 0.0
    %137 = vmatprep.subr.mxu0 0.0
    %138 = vmatpush1.msra.mxu0 0.0
    %139 = vmatprep.subr.mxu0 0.0
    %140 = vmatpush1.msra.mxu0 0.0
    %141 = vmatprep.subr.mxu0 0.0
    %142 = vmatpush1.msra.mxu0 0.0
    %143 = vmatprep.subr.mxu0 0.0
    %144 = vmatpush1.msra.mxu0 0.0
    %145 = vmatprep.subr.mxu0 0.0
    %146 = vmatpush1.msra.mxu0 0.0
    %147 = vmatprep.subr.mxu0 0.0
    %148 = vmatpush1.msra.mxu0 0.0
    %149 = vmatprep.subr.mxu0 0.0
    %150 = vmatpush1.msra.mxu0 0.0
    %151 = vmatprep.subr.mxu0 0.0
    %152 = vmatpush1.msra.mxu0 0.0
    %153 = vmatprep.subr.mxu0 0.0
    %154 = vmatpush1.msra.mxu0 0.0
    %155 = vmatprep.subr.mxu0 0.0
    %156 = vmatpush1.msra.mxu0 0.0
    %157 = vmatprep.subr.mxu0 0.0
    %158 = vmatpush1.msra.mxu0 0.0
    %159 = vmatprep.subr.mxu0 0.0
    %160 = vmatpush1.msra.mxu0 0.0
    %161 = vmatprep.subr.mxu0 0.0
    %162 = vmatpush1.msra.mxu0 0.0
    %163 = vmatprep.mubr.f32.mxu0 0.0
    %164 = vmatmul.mubr.f32.gmra.mrb[0].mxu0 %v93
    %v165 = vpop.f32.mrb[0].mxu0
    %v166 = vadd.f32 0.0, %v165
    %v167 = vpop.f32.mrb[0].mxu0
    %168 = vdwg.mxu0
    %v169 = vld [vmem:[%s3] sm:$0xff]
    %v170 = vld [vmem:[%s3 + $0x8] sm:$0xff]
    %v171 = vld [vmem:[%s3 + $0x10] sm:$0xff]
    %v172 = vld [vmem:[%s3 + $0x18] sm:$0x1]
    %v174 = vsel %vm95, %v172, 0
    %176 = vmatprep.subr.mxu0 0.0
    %177 = vmatpush1.msra.mxu0 %v169
    %178 = vmatprep.subr.mxu0 0.0
    %179 = vmatpush1.msra.mxu0 %v170
    %180 = vmatprep.subr.mxu0 0.0
    %181 = vmatpush1.msra.mxu0 %v171
    %182 = vmatprep.subr.mxu0 0.0
    %183 = vmatpush1.msra.mxu0 %v174
    %184 = vmatprep.subr.mxu0 0.0
    %185 = vmatpush1.msra.mxu0 0.0
    %186 = vmatprep.subr.mxu0 0.0
    %187 = vmatpush1.msra.mxu0 0.0
    %188 = vmatprep.subr.mxu0 0.0
    %189 = vmatpush1.msra.mxu0 0.0
    %190 = vmatprep.subr.mxu0 0.0
    %191 = vmatpush1.msra.mxu0 0.0
    %192 = vmatprep.subr.mxu0 0.0
    %193 = vmatpush1.msra.mxu0 0.0
    %194 = vmatprep.subr.mxu0 0.0
    %195 = vmatpush1.msra.mxu0 0.0
    %196 = vmatprep.subr.mxu0 0.0
    %197 = vmatpush1.msra.mxu0 0.0
    %198 = vmatprep.subr.mxu0 0.0
    %199 = vmatpush1.msra.mxu0 0.0
    %200 = vmatprep.subr.mxu0 0.0
    %201 = vmatpush1.msra.mxu0 0.0
    %202 = vmatprep.subr.mxu0 0.0
    %203 = vmatpush1.msra.mxu0 0.0
    %204 = vmatprep.subr.mxu0 0.0
    %205 = vmatpush1.msra.mxu0 0.0
    %206 = vmatprep.subr.mxu0 0.0
    %207 = vmatpush1.msra.mxu0 0.0
    %208 = vmatprep.subr.mxu0 0.0
    %209 = vmatpush1.msra.mxu0 0.0
    %210 = vmatprep.subr.mxu0 0.0
    %211 = vmatpush1.msra.mxu0 0.0
    %212 = vmatprep.subr.mxu0 0.0
    %213 = vmatpush1.msra.mxu0 0.0
    %214 = vmatprep.subr.mxu0 0.0
    %215 = vmatpush1.msra.mxu0 0.0
    %216 = vmatprep.subr.mxu0 0.0
    %217 = vmatpush1.msra.mxu0 0.0
    %218 = vmatprep.subr.mxu0 0.0
    %219 = vmatpush1.msra.mxu0 0.0
    %220 = vmatprep.subr.mxu0 0.0
    %221 = vmatpush1.msra.mxu0 0.0
    %222 = vmatprep.subr.mxu0 0.0
    %223 = vmatpush1.msra.mxu0 0.0
    %224 = vmatprep.subr.mxu0 0.0
    %225 = vmatpush1.msra.mxu0 0.0
    %226 = vmatprep.subr.mxu0 0.0
    %227 = vmatpush1.msra.mxu0 0.0
    %228 = vmatprep.subr.mxu0 0.0
    %229 = vmatpush1.msra.mxu0 0.0
    %230 = vmatprep.subr.mxu0 0.0
    %231 = vmatpush1.msra.mxu0 0.0
    %232 = vmatprep.subr.mxu0 0.0
    %233 = vmatpush1.msra.mxu0 0.0
    %234 = vmatprep.subr.mxu0 0.0
    %235 = vmatpush1.msra.mxu0 0.0
    %236 = vmatprep.subr.mxu0 0.0
    %237 = vmatpush1.msra.mxu0 0.0
    %238 = vmatprep.subr.mxu0 0.0
    %239 = vmatpush1.msra.mxu0 0.0
    %240 = vmatprep.mubr.f32.mxu0 0.0
    %241 = vmatmul.mubr.f32.gmra.mrb[0].mxu0 %v93
    %v242 = vpop.f32.mrb[0].mxu0
    %v243 = vadd.f32 0.0, %v242
    %v244 = vpop.f32.mrb[0].mxu0
    %245 = vdwg.mxu0
    %v246 = vld [vmem:[#allocation2] sm:$0xff]
    %v247 = vld [vmem:[#allocation2 + $0x8] sm:$0xff]
    %v248 = vld [vmem:[#allocation2 + $0x10] sm:$0xff]
    %v249 = vld [vmem:[#allocation2 + $0x18] sm:$0x1]
    %v251 = vsel %vm95, %v249, 0
    %253 = vmatprep.subr.mxu0 0.0
    %254 = vmatpush1.msra.mxu0 %v246
    %255 = vmatprep.subr.mxu0 0.0
    %256 = vmatpush1.msra.mxu0 %v247
    %257 = vmatprep.subr.mxu0 0.0
    %258 = vmatpush1.msra.mxu0 %v248
    %259 = vmatprep.subr.mxu0 0.0
    %260 = vmatpush1.msra.mxu0 %v251
    %261 = vmatprep.subr.mxu0 0.0
    %262 = vmatpush1.msra.mxu0 0.0
    %263 = vmatprep.subr.mxu0 0.0
    %264 = vmatpush1.msra.mxu0 0.0
    %265 = vmatprep.subr.mxu0 0.0
    %266 = vmatpush1.msra.mxu0 0.0
    %267 = vmatprep.subr.mxu0 0.0
    %268 = vmatpush1.msra.mxu0 0.0
    %269 = vmatprep.subr.mxu0 0.0
    %270 = vmatpush1.msra.mxu0 0.0
    %271 = vmatprep.subr.mxu0 0.0
    %272 = vmatpush1.msra.mxu0 0.0
    %273 = vmatprep.subr.mxu0 0.0
    %274 = vmatpush1.msra.mxu0 0.0
    %275 = vmatprep.subr.mxu0 0.0
    %276 = vmatpush1.msra.mxu0 0.0
    %277 = vmatprep.subr.mxu0 0.0
    %278 = vmatpush1.msra.mxu0 0.0
    %279 = vmatprep.subr.mxu0 0.0
    %280 = vmatpush1.msra.mxu0 0.0
    %281 = vmatprep.subr.mxu0 0.0
    %282 = vmatpush1.msra.mxu0 0.0
    %283 = vmatprep.subr.mxu0 0.0
    %284 = vmatpush1.msra.mxu0 0.0
    %285 = vmatprep.subr.mxu0 0.0
    %286 = vmatpush1.msra.mxu0 0.0
    %287 = vmatprep.subr.mxu0 0.0
    %288 = vmatpush1.msra.mxu0 0.0
    %289 = vmatprep.subr.mxu0 0.0
    %290 = vmatpush1.msra.mxu0 0.0
    %291 = vmatprep.subr.mxu0 0.0
    %292 = vmatpush1.msra.mxu0 0.0
    %293 = vmatprep.subr.mxu0 0.0
    %294 = vmatpush1.msra.mxu0 0.0
    %295 = vmatprep.subr.mxu0 0.0
    %296 = vmatpush1.msra.mxu0 0.0
    %297 = vmatprep.subr.mxu0 0.0
    %298 = vmatpush1.msra.mxu0 0.0
    %299 = vmatprep.subr.mxu0 0.0
    %300 = vmatpush1.msra.mxu0 0.0
    %301 = vmatprep.subr.mxu0 0.0
    %302 = vmatpush1.msra.mxu0 0.0
    %303 = vmatprep.subr.mxu0 0.0
    %304 = vmatpush1.msra.mxu0 0.0
    %305 = vmatprep.subr.mxu0 0.0
    %306 = vmatpush1.msra.mxu0 0.0
    %307 = vmatprep.subr.mxu0 0.0
    %308 = vmatpush1.msra.mxu0 0.0
    %309 = vmatprep.subr.mxu0 0.0
    %310 = vmatpush1.msra.mxu0 0.0
    %311 = vmatprep.subr.mxu0 0.0
    %312 = vmatpush1.msra.mxu0 0.0
    %313 = vmatprep.subr.mxu0 0.0
    %314 = vmatpush1.msra.mxu0 0.0
    %315 = vmatprep.subr.mxu0 0.0
    %316 = vmatpush1.msra.mxu0 0.0
    %317 = vmatprep.mubr.f32.mxu0 0.0
    %318 = vmatmul.mubr.f32.gmra.mrb[0].mxu0 %v93
    %v319 = vpop.f32.mrb[0].mxu0
    %v320 = vadd.f32 0.0, %v319
    %v321 = vpop.f32.mrb[0].mxu0
    %322 = vdwg.mxu0
    %v323 = vld [vmem:[%s1] sm:$0xff]
    %v324 = vld [vmem:[%s1 + $0x8] sm:$0xff]
    %v325 = vld [vmem:[%s1 + $0x10] sm:$0xff]
    %v326 = vld [vmem:[%s1 + $0x18] sm:$0x1]
    %v327 = vmul.f32 %v166, %v243
    %v329 = vsel %vm91, %v327, 0
    %v332 = vsel %vm95, %v326, 0
    %334 = vmatprep.subr.mxu0 0.0
    %335 = vmatpush1.msra.mxu0 %v323
    %336 = vmatprep.subr.mxu0 0.0
    %337 = vmatpush1.msra.mxu0 %v324
    %338 = vmatprep.subr.mxu0 0.0
    %339 = vmatpush1.msra.mxu0 %v325
    %340 = vmatprep.subr.mxu0 0.0
    %341 = vmatpush1.msra.mxu0 %v332
    %342 = vmatprep.subr.mxu0 0.0
    %343 = vmatpush1.msra.mxu0 0.0
    %344 = vmatprep.subr.mxu0 0.0
    %345 = vmatpush1.msra.mxu0 0.0
    %346 = vmatprep.subr.mxu0 0.0
    %347 = vmatpush1.msra.mxu0 0.0
    %348 = vmatprep.subr.mxu0 0.0
    %349 = vmatpush1.msra.mxu0 0.0
    %350 = vmatprep.subr.mxu0 0.0
    %351 = vmatpush1.msra.mxu0 0.0
    %352 = vmatprep.subr.mxu0 0.0
    %353 = vmatpush1.msra.mxu0 0.0
    %354 = vmatprep.subr.mxu0 0.0
    %355 = vmatpush1.msra.mxu0 0.0
    %356 = vmatprep.subr.mxu0 0.0
    %357 = vmatpush1.msra.mxu0 0.0
    %358 = vmatprep.subr.mxu0 0.0
    %359 = vmatpush1.msra.mxu0 0.0
    %360 = vmatprep.subr.mxu0 0.0
    %361 = vmatpush1.msra.mxu0 0.0
    %362 = vmatprep.subr.mxu0 0.0
    %363 = vmatpush1.msra.mxu0 0.0
    %364 = vmatprep.subr.mxu0 0.0
    %365 = vmatpush1.msra.mxu0 0.0
    %366 = vmatprep.subr.mxu0 0.0
    %367 = vmatpush1.msra.mxu0 0.0
    %368 = vmatprep.subr.mxu0 0.0
    %369 = vmatpush1.msra.mxu0 0.0
    %370 = vmatprep.subr.mxu0 0.0
    %371 = vmatpush1.msra.mxu0 0.0
    %372 = vmatprep.subr.mxu0 0.0
    %373 = vmatpush1.msra.mxu0 0.0
    %374 = vmatprep.subr.mxu0 0.0
    %375 = vmatpush1.msra.mxu0 0.0
    %376 = vmatprep.subr.mxu0 0.0
    %377 = vmatpush1.msra.mxu0 0.0
    %378 = vmatprep.subr.mxu0 0.0
    %379 = vmatpush1.msra.mxu0 0.0
    %380 = vmatprep.subr.mxu0 0.0
    %381 = vmatpush1.msra.mxu0 0.0
    %382 = vmatprep.subr.mxu0 0.0
    %383 = vmatpush1.msra.mxu0 0.0
    %384 = vmatprep.subr.mxu0 0.0
    %385 = vmatpush1.msra.mxu0 0.0
    %386 = vmatprep.subr.mxu0 0.0
    %387 = vmatpush1.msra.mxu0 0.0
    %388 = vmatprep.subr.mxu0 0.0
    %389 = vmatpush1.msra.mxu0 0.0
    %390 = vmatprep.subr.mxu0 0.0
    %391 = vmatpush1.msra.mxu0 0.0
    %392 = vmatprep.subr.mxu0 0.0
    %393 = vmatpush1.msra.mxu0 0.0
    %394 = vmatprep.subr.mxu0 0.0
    %395 = vmatpush1.msra.mxu0 0.0
    %396 = vmatprep.subr.mxu0 0.0
    %397 = vmatpush1.msra.mxu0 0.0
    %398 = vmatprep.mubr.f32.mxu0 0.0
    %399 = vmatmul.mubr.f32.gmra.mrb[0].mxu0 %v329
    %v400 = vpop.f32.mrb[0].mxu0
    %v401 = vadd.f32 0.0, %v400
    %v402 = vpop.f32.mrb[0].mxu0
    %403 = vdwg.mxu0
    %v404 = vmul.f32 %v401, 0.2
    %v405 = vsub.f32 %v404, %v404
    %v406 = vmul.f32 %v405, 1.442695
    %v407 = vpow.pop %v406
    %v408 = vrcp.pop %v407
    %v409 = vmul.f32 %v407, %v408
    %vm410 = vcmask 39936
    %v412 = vsel %vm410, %v409, 0
    %v415 = vsel %vm410, %v323, 0
    %v418 = vsel %vm410, %v324, 0
    %v421 = vsel %vm410, %v325, 0
    %v423 = vsel %vm410, %v326, 0
    %425 = vmatprep.subr.mxu0 0.0
    %426 = vmatpush1.xpose.msra.mxu0 %v415
    %427 = vmatprep.subr.mxu0 0.0
    %428 = vmatpush1.xpose.msra.mxu0 %v418
    %429 = vmatprep.subr.mxu0 0.0
    %430 = vmatpush1.xpose.msra.mxu0 %v421
    %431 = vmatprep.subr.mxu0 0.0
    %432 = vmatpush1.xpose.msra.mxu0 %v423
    %433 = vmatprep.subr.mxu0 0.0
    %434 = vmatpush1.xpose.msra.mxu0 0.0
    %435 = vmatprep.subr.mxu0 0.0
    %436 = vmatpush1.xpose.msra.mxu0 0.0
    %437 = vmatprep.subr.mxu0 0.0
    %438 = vmatpush1.xpose.msra.mxu0 0.0
    %439 = vmatprep.subr.mxu0 0.0
    %440 = vmatpush1.xpose.msra.mxu0 0.0
    %441 = vmatprep.subr.mxu0 0.0
    %442 = vmatpush1.xpose.msra.mxu0 0.0
    %443 = vmatprep.subr.mxu0 0.0
    %444 = vmatpush1.xpose.msra.mxu0 0.0
    %445 = vmatprep.subr.mxu0 0.0
    %446 = vmatpush1.xpose.msra.mxu0 0.0
    %447 = vmatprep.subr.mxu0 0.0
    %448 = vmatpush1.xpose.msra.mxu0 0.0
    %449 = vmatprep.subr.mxu0 0.0
    %450 = vmatpush1.xpose.msra.mxu0 0.0
    %451 = vmatprep.subr.mxu0 0.0
    %452 = vmatpush1.xpose.msra.mxu0 0.0
    %453 = vmatprep.subr.mxu0 0.0
    %454 = vmatpush1.xpose.msra.mxu0 0.0
    %455 = vmatprep.subr.mxu0 0.0
    %456 = vmatpush1.xpose.msra.mxu0 0.0
    %457 = vmatprep.subr.mxu0 0.0
    %458 = vmatpush1.xpose.msra.mxu0 0.0
    %459 = vmatprep.subr.mxu0 0.0
    %460 = vmatpush1.xpose.msra.mxu0 0.0
    %461 = vmatprep.subr.mxu0 0.0
    %462 = vmatpush1.xpose.msra.mxu0 0.0
    %463 = vmatprep.subr.mxu0 0.0
    %464 = vmatpush1.xpose.msra.mxu0 0.0
    %465 = vmatprep.subr.mxu0 0.0
    %466 = vmatpush1.xpose.msra.mxu0 0.0
    %467 = vmatprep.subr.mxu0 0.0
    %468 = vmatpush1.xpose.msra.mxu0 0.0
    %469 = vmatprep.subr.mxu0 0.0
    %470 = vmatpush1.xpose.msra.mxu0 0.0
    %471 = vmatprep.subr.mxu0 0.0
    %472 = vmatpush1.xpose.msra.mxu0 0.0
    %473 = vmatprep.subr.mxu0 0.0
    %474 = vmatpush1.xpose.msra.mxu0 0.0
    %475 = vmatprep.subr.mxu0 0.0
    %476 = vmatpush1.xpose.msra.mxu0 0.0
    %477 = vmatprep.subr.mxu0 0.0
    %478 = vmatpush1.xpose.msra.mxu0 0.0
    %479 = vmatprep.subr.mxu0 0.0
    %480 = vmatpush1.xpose.msra.mxu0 0.0
    %481 = vmatprep.subr.mxu0 0.0
    %482 = vmatpush1.xpose.msra.mxu0 0.0
    %483 = vmatprep.subr.mxu0 0.0
    %484 = vmatpush1.xpose.msra.mxu0 0.0
    %485 = vmatprep.subr.mxu0 0.0
    %486 = vmatpush1.xpose.msra.mxu0 0.0
    %487 = vmatprep.subr.mxu0 0.0
    %488 = vmatpush1.xpose.msra.mxu0 0.0
    %489 = vmatprep.mubr.f32.mxu0 0.0
    %490 = vmatmul.mubr.f32.gmra.mrb[0].mxu0 %v412
    %v491 = vpop.f32.mrb[0].mxu0
    %v492 = vadd.f32 0.0, %v491
    %v493 = vpop.f32.mrb[0].mxu0
    %494 = vdwg.mxu0
    %v495 = vmul.f32 %v492, %v320
    %v496 = vld [vmem:[#allocation5] sm:$0xff]
    %v497 = vld [vmem:[#allocation5 + $0x8] sm:$0xff]
    %v498 = vld [vmem:[#allocation5 + $0x10] sm:$0xff]
    %v499 = vld [vmem:[#allocation5 + $0x18] sm:$0x1]
    %v500 = vld [vmem:[%s6] sm:$0x1]
    %v502 = vlaneseq
    %v503 = vshrl.u32 %v502, 7
    %v504 = vsub.s32 0, %v503
    %v505 = vrot.slane %v500, %v504
    %v508 = vsel %vm91, %v495, 0
    %v511 = vsel %vm95, %v499, 0
    %513 = vmatprep.subr.mxu0 0.0
    %514 = vmatpush1.msra.mxu0 %v496
    %515 = vmatprep.subr.mxu0 0.0
    %516 = vmatpush1.msra.mxu0 %v497
    %517 = vmatprep.subr.mxu0 0.0
    %518 = vmatpush1.msra.mxu0 %v498
    %519 = vmatprep.subr.mxu0 0.0
    %520 = vmatpush1.msra.mxu0 %v511
    %521 = vmatprep.subr.mxu0 0.0
    %522 = vmatpush1.msra.mxu0 0.0
    %523 = vmatprep.subr.mxu0 0.0
    %524 = vmatpush1.msra.mxu0 0.0
    %525 = vmatprep.subr.mxu0 0.0
    %526 = vmatpush1.msra.mxu0 0.0
    %527 = vmatprep.subr.mxu0 0.0
    %528 = vmatpush1.msra.mxu0 0.0
    %529 = vmatprep.subr.mxu0 0.0
    %530 = vmatpush1.msra.mxu0 0.0
    %531 = vmatprep.subr.mxu0 0.0
    %532 = vmatpush1.msra.mxu0 0.0
    %533 = vmatprep.subr.mxu0 0.0
    %534 = vmatpush1.msra.mxu0 0.0
    %535 = vmatprep.subr.mxu0 0.0
    %536 = vmatpush1.msra.mxu0 0.0
    %537 = vmatprep.subr.mxu0 0.0
    %538 = vmatpush1.msra.mxu0 0.0
    %539 = vmatprep.subr.mxu0 0.0
    %540 = vmatpush1.msra.mxu0 0.0
    %541 = vmatprep.subr.mxu0 0.0
    %542 = vmatpush1.msra.mxu0 0.0
    %543 = vmatprep.subr.mxu0 0.0
    %544 = vmatpush1.msra.mxu0 0.0
    %545 = vmatprep.subr.mxu0 0.0
    %546 = vmatpush1.msra.mxu0 0.0
    %547 = vmatprep.subr.mxu0 0.0
    %548 = vmatpush1.msra.mxu0 0.0
    %549 = vmatprep.subr.mxu0 0.0
    %550 = vmatpush1.msra.mxu0 0.0
    %551 = vmatprep.subr.mxu0 0.0
    %552 = vmatpush1.msra.mxu0 0.0
    %553 = vmatprep.subr.mxu0 0.0
    %554 = vmatpush1.msra.mxu0 0.0
    %555 = vmatprep.subr.mxu0 0.0
    %556 = vmatpush1.msra.mxu0 0.0
    %557 = vmatprep.subr.mxu0 0.0
    %558 = vmatpush1.msra.mxu0 0.0
    %559 = vmatprep.subr.mxu0 0.0
    %560 = vmatpush1.msra.mxu0 0.0
    %561 = vmatprep.subr.mxu0 0.0
    %562 = vmatpush1.msra.mxu0 0.0
    %563 = vmatprep.subr.mxu0 0.0
    %564 = vmatpush1.msra.mxu0 0.0
    %565 = vmatprep.subr.mxu0 0.0
    %566 = vmatpush1.msra.mxu0 0.0
    %567 = vmatprep.subr.mxu0 0.0
    %568 = vmatpush1.msra.mxu0 0.0
    %569 = vmatprep.subr.mxu0 0.0
    %570 = vmatpush1.msra.mxu0 0.0
    %571 = vmatprep.subr.mxu0 0.0
    %572 = vmatpush1.msra.mxu0 0.0
    %573 = vmatprep.subr.mxu0 0.0
    %574 = vmatpush1.msra.mxu0 0.0
    %575 = vmatprep.subr.mxu0 0.0
    %576 = vmatpush1.msra.mxu0 0.0
    %577 = vmatprep.mubr.f32.mxu0 0.0
    %578 = vmatmul.mubr.f32.gmra.mrb[0].mxu0 %v508
    %v579 = vpop.f32.mrb[0].mxu0
    %v580 = vadd.f32 %v505, %v579
    %v581 = vpop.f32.mrb[0].mxu0
    %582 = vdwg.mxu0
    %v583 = vld [vmem:[#allocation7] sm:$0xff]
    %v584 = vld [vmem:[#allocation7 + $0x8] sm:$0xff]
    %v585 = vld [vmem:[#allocation7 + $0x10] sm:$0xff]
    %v586 = vld [vmem:[#allocation7 + $0x18] sm:$0x1]
    %v587 = vld [vmem:[%s8] sm:$0x1]
    %v589 = vlaneseq
    %v590 = vshrl.u32 %v589, 7
    %v591 = vsub.s32 0, %v590
    %v592 = vrot.slane %v587, %v591
    %v595 = vsel %vm91, %v580, 0
    %v598 = vsel %vm95, %v586, 0
    %600 = vmatprep.subr.mxu0 0.0
    %601 = vmatpush1.msra.mxu0 %v583
    %602 = vmatprep.subr.mxu0 0.0
    %603 = vmatpush1.msra.mxu0 %v584
    %604 = vmatprep.subr.mxu0 0.0
    %605 = vmatpush1.msra.mxu0 %v585
    %606 = vmatprep.subr.mxu0 0.0
    %607 = vmatpush1.msra.mxu0 %v598
    %608 = vmatprep.subr.mxu0 0.0
    %609 = vmatpush1.msra.mxu0 0.0
    %610 = vmatprep.subr.mxu0 0.0
    %611 = vmatpush1.msra.mxu0 0.0
    %612 = vmatprep.subr.mxu0 0.0
    %613 = vmatpush1.msra.mxu0 0.0
    %614 = vmatprep.subr.mxu0 0.0
    %615 = vmatpush1.msra.mxu0 0.0
    %616 = vmatprep.subr.mxu0 0.0
    %617 = vmatpush1.msra.mxu0 0.0
    %618 = vmatprep.subr.mxu0 0.0
    %619 = vmatpush1.msra.mxu0 0.0
    %620 = vmatprep.subr.mxu0 0.0
    %621 = vmatpush1.msra.mxu0 0.0
    %622 = vmatprep.subr.mxu0 0.0
    %623 = vmatpush1.msra.mxu0 0.0
    %624 = vmatprep.subr.mxu0 0.0
    %625 = vmatpush1.msra.mxu0 0.0
    %626 = vmatprep.subr.mxu0 0.0
    %627 = vmatpush1.msra.mxu0 0.0
    %628 = vmatprep.subr.mxu0 0.0
    %629 = vmatpush1.msra.mxu0 0.0
    %630 = vmatprep.subr.mxu0 0.0
    %631 = vmatpush1.msra.mxu0 0.0
    %632 = vmatprep.subr.mxu0 0.0
    %633 = vmatpush1.msra.mxu0 0.0
    %634 = vmatprep.subr.mxu0 0.0
    %635 = vmatpush1.msra.mxu0 0.0
    %636 = vmatprep.subr.mxu0 0.0
    %637 = vmatpush1.msra.mxu0 0.0
    %638 = vmatprep.subr.mxu0 0.0
    %639 = vmatpush1.msra.mxu0 0.0
    %640 = vmatprep.subr.mxu0 0.0
    %641 = vmatpush1.msra.mxu0 0.0
    %642 = vmatprep.subr.mxu0 0.0
    %643 = vmatpush1.msra.mxu0 0.0
    %644 = vmatprep.subr.mxu0 0.0
    %645 = vmatpush1.msra.mxu0 0.0
    %646 = vmatprep.subr.mxu0 0.0
    %647 = vmatpush1.msra.mxu0 0.0
    %648 = vmatprep.subr.mxu0 0.0
    %649 = vmatpush1.msra.mxu0 0.0
    %650 = vmatprep.subr.mxu0 0.0
    %651 = vmatpush1.msra.mxu0 0.0
    %652 = vmatprep.subr.mxu0 0.0
    %653 = vmatpush1.msra.mxu0 0.0
    %654 = vmatprep.subr.mxu0 0.0
    %655 = vmatpush1.msra.mxu0 0.0
    %656 = vmatprep.subr.mxu0 0.0
    %657 = vmatpush1.msra.mxu0 0.0
    %658 = vmatprep.subr.mxu0 0.0
    %659 = vmatpush1.msra.mxu0 0.0
    %660 = vmatprep.subr.mxu0 0.0
    %661 = vmatpush1.msra.mxu0 0.0
    %662 = vmatprep.subr.mxu0 0.0
    %663 = vmatpush1.msra.mxu0 0.0
    %664 = vmatprep.mubr.f32.mxu0 0.0
    %665 = vmatmul.mubr.f32.gmra.mrb[0].mxu0 %v595
    %v666 = vpop.f32.mrb[0].mxu0
    %v667 = vadd.f32 %v592, %v666
    %v668 = vpop.f32.mrb[0].mxu0
    %669 = vdwg.mxu0
    %v670 = vmax.f32 %v667, 0.0
    %v671 = vld [vmem:[%s9] sm:$0xff]
    %v672 = vld [vmem:[%s9 + $0x8] sm:$0xff]
    %v673 = vld [vmem:[%s9 + $0x10] sm:$0xff]
    %v674 = vld [vmem:[%s9 + $0x18] sm:$0xff]
    %v675 = vld [vmem:[%s9 + $0x20] sm:$0xff]
    %v676 = vld [vmem:[%s9 + $0x28] sm:$0xff]
    %v677 = vld [vmem:[%s9 + $0x30] sm:$0xff]
    %v678 = vld [vmem:[%s9 + $0x38] sm:$0xff]
    %v679 = vld [vmem:[%s9 + $0x40] sm:$0xff]
    %v680 = vld [vmem:[%s9 + $0x48] sm:$0xff]
    %v681 = vld [vmem:[%s9 + $0x50] sm:$0xff]
    %v682 = vld [vmem:[%s9 + $0x58] sm:$0xff]
    %v683 = vld [vmem:[%s9 + $0x60] sm:$0xff]
    %v684 = vld [vmem:[%s9 + $0x68] sm:$0xff]
    %v685 = vld [vmem:[%s9 + $0x70] sm:$0xff]
    %v686 = vld [vmem:[%s9 + $0x78] sm:$0xff]
    %v687 = vld [vmem:[%s9 + $0x80] sm:$0xff]
    %v688 = vld [vmem:[%s9 + $0x88] sm:$0xff]
    %v689 = vld [vmem:[%s9 + $0x90] sm:$0xff]
    %v690 = vld [vmem:[%s9 + $0x98] sm:$0xff]
    %v691 = vld [vmem:[%s9 + $0xa0] sm:$0xff]
    %v692 = vld [vmem:[%s9 + $0xa8] sm:$0xff]
    %v693 = vld [vmem:[%s9 + $0xb0] sm:$0xff]
    %v694 = vld [vmem:[%s9 + $0xb8] sm:$0xff]
    %v695 = vld [vmem:[%s9 + $0xc0] sm:$0xff]
    %v696 = vld [vmem:[%s9 + $0xc8] sm:$0xff]
    %v697 = vld [vmem:[%s9 + $0xd0] sm:$0xff]
    %v698 = vld [vmem:[%s9 + $0xd8] sm:$0xff]
    %v699 = vld [vmem:[%s9 + $0xe0] sm:$0xff]
    %v700 = vld [vmem:[%s9 + $0xe8] sm:$0xff]
    %v701 = vld [vmem:[%s9 + $0xf0] sm:$0xff]
    %v702 = vld [vmem:[%s9 + $0xf8] sm:$0xff]
    %v703 = vld [vmem:[%s10] sm:$0x3]
    %v705 = vlaneseq
    %v706 = vshrl.u32 %v705, 7
    %v707 = vsub.s32 0, %v706
    %v708 = vrot.slane %v703, %v707
    %v709 = vlaneseq
    %v710 = vshrl.u32 %v709, 7
    %v711 = vsub.s32 1, %v710
    %v712 = vrot.slane %v703, %v711
    %715 = vmatprep.subr.mxu0 %v672
    %716 = vmatpush1.msra.mxu0 %v671
    %717 = vmatprep.subr.mxu0 %v674
    %718 = vmatpush1.msra.mxu0 %v673
    %719 = vmatprep.subr.mxu0 %v676
    %720 = vmatpush1.msra.mxu0 %v675
    %721 = vmatprep.subr.mxu0 %v678
    %722 = vmatpush1.msra.mxu0 %v677
    %723 = vmatprep.subr.mxu0 %v680
    %724 = vmatpush1.msra.mxu0 %v679
    %725 = vmatprep.subr.mxu0 %v682
    %726 = vmatpush1.msra.mxu0 %v681
    %727 = vmatprep.subr.mxu0 %v684
    %728 = vmatpush1.msra.mxu0 %v683
    %729 = vmatprep.subr.mxu0 %v686
    %730 = vmatpush1.msra.mxu0 %v685
    %731 = vmatprep.subr.mxu0 %v688
    %732 = vmatpush1.msra.mxu0 %v687
    %733 = vmatprep.subr.mxu0 %v690
    %734 = vmatpush1.msra.mxu0 %v689
    %735 = vmatprep.subr.mxu0 %v692
    %736 = vmatpush1.msra.mxu0 %v691
    %737 = vmatprep.subr.mxu0 %v694
    %738 = vmatpush1.msra.mxu0 %v693
    %739 = vmatprep.subr.mxu0 %v696
    %740 = vmatpush1.msra.mxu0 %v695
    %741 = vmatprep.subr.mxu0 %v698
    %742 = vmatpush1.msra.mxu0 %v697
    %743 = vmatprep.subr.mxu0 %v700
    %744 = vmatpush1.msra.mxu0 %v699
    %745 = vmatprep.subr.mxu0 %v702
    %746 = vmatpush1.msra.mxu0 %v701
    %747 = vmatprep.subr.mxu0 0.0
    %748 = vmatpush1.msra.mxu0 0.0
    %749 = vmatprep.subr.mxu0 0.0
    %750 = vmatpush1.msra.mxu0 0.0
    %751 = vmatprep.subr.mxu0 0.0
    %752 = vmatpush1.msra.mxu0 0.0
    %753 = vmatprep.subr.mxu0 0.0
    %754 = vmatpush1.msra.mxu0 0.0
    %755 = vmatprep.subr.mxu0 0.0
    %756 = vmatpush1.msra.mxu0 0.0
    %757 = vmatprep.subr.mxu0 0.0
    %758 = vmatpush1.msra.mxu0 0.0
    %759 = vmatprep.subr.mxu0 0.0
    %760 = vmatpush1.msra.mxu0 0.0
    %761 = vmatprep.subr.mxu0 0.0
    %762 = vmatpush1.msra.mxu0 0.0
    %763 = vmatprep.subr.mxu0 0.0
    %764 = vmatpush1.msra.mxu0 0.0
    %765 = vmatprep.subr.mxu0 0.0
    %766 = vmatpush1.msra.mxu0 0.0
    %767 = vmatprep.subr.mxu0 0.0
    %768 = vmatpush1.msra.mxu0 0.0
    %769 = vmatprep.subr.mxu0 0.0
    %770 = vmatpush1.msra.mxu0 0.0
    %771 = vmatprep.subr.mxu0 0.0
    %772 = vmatpush1.msra.mxu0 0.0
    %773 = vmatprep.subr.mxu0 0.0
    %774 = vmatpush1.msra.mxu0 0.0
    %775 = vmatprep.subr.mxu0 0.0
    %776 = vmatpush1.msra.mxu0 0.0
    %777 = vmatprep.subr.mxu0 0.0
    %778 = vmatpush1.msra.mxu0 0.0
    %779 = vmatprep.mubr.f32.mxu0 0.0
    %780 = vmatmul.mubr.f32.gmra.mrb[0].mxu0 %v670
    %v781 = vpop.f32.mrb[0].mxu0
    %v782 = vadd.f32 %v708, %v781
    %v783 = vpop.f32.mrb[0].mxu0
    %v784 = vadd.f32 %v712, %v783
    %785 = vdwg.mxu0
    %v786 = vmax.f32 %v782, 0.0
    %v787 = vmax.f32 %v784, 0.0
    %v788 = vld [vmem:[%s11] sm:$0xff]
    %v789 = vld [vmem:[%s11 + $0x8] sm:$0xff]
    %v790 = vld [vmem:[%s11 + $0x10] sm:$0xff]
    %v791 = vld [vmem:[%s11 + $0x18] sm:$0xff]
    %v792 = vld [vmem:[%s11 + $0x20] sm:$0xff]
    %v793 = vld [vmem:[%s11 + $0x28] sm:$0xff]
    %v794 = vld [vmem:[%s11 + $0x30] sm:$0xff]
    %v795 = vld [vmem:[%s11 + $0x38] sm:$0xff]
    %v796 = vld [vmem:[%s11 + $0x40] sm:$0xff]
    %v797 = vld [vmem:[%s11 + $0x48] sm:$0xff]
    %v798 = vld [vmem:[%s11 + $0x50] sm:$0xff]
    %v799 = vld [vmem:[%s11 + $0x58] sm:$0xff]
    %v800 = vld [vmem:[%s11 + $0x60] sm:$0xff]
    %v801 = vld [vmem:[%s11 + $0x68] sm:$0xff]
    %v802 = vld [vmem:[%s11 + $0x70] sm:$0xff]
    %v803 = vld [vmem:[%s11 + $0x78] sm:$0xff]
    %v804 = vld [vmem:[%s11 + $0x80] sm:$0xff]
    %v805 = vld [vmem:[%s11 + $0x88] sm:$0xff]
    %v806 = vld [vmem:[%s11 + $0x90] sm:$0xff]
    %v807 = vld [vmem:[%s11 + $0x98] sm:$0xff]
    %v808 = vld [vmem:[%s11 + $0xa0] sm:$0xff]
    %v809 = vld [vmem:[%s11 + $0xa8] sm:$0xff]
    %v810 = vld [vmem:[%s11 + $0xb0] sm:$0xff]
    %v811 = vld [vmem:[%s11 + $0xb8] sm:$0xff]
    %v812 = vld [vmem:[%s11 + $0xc0] sm:$0xff]
    %v813 = vld [vmem:[%s11 + $0xc8] sm:$0xff]
    %v814 = vld [vmem:[%s11 + $0xd0] sm:$0xff]
    %v815 = vld [vmem:[%s11 + $0xd8] sm:$0xff]
    %v816 = vld [vmem:[%s11 + $0xe0] sm:$0xff]
    %v817 = vld [vmem:[%s11 + $0xe8] sm:$0xff]
    %v818 = vld [vmem:[%s11 + $0xf0] sm:$0xff]
    %v819 = vld [vmem:[%s11 + $0xf8] sm:$0xff]
    %v820 = vld [vmem:[%s12] sm:$0x1]
    %v822 = vlaneseq
    %v823 = vshrl.u32 %v822, 7
    %v824 = vsub.s32 0, %v823
    %v825 = vrot.slane %v820, %v824
    %827 = vmatprep.subr.mxu0 0.0
    %828 = vmatpush1.msra.mxu0 %v788
    %829 = vmatprep.subr.mxu0 0.0
    %830 = vmatpush1.msra.mxu0 %v789
    %831 = vmatprep.subr.mxu0 0.0
    %832 = vmatpush1.msra.mxu0 %v790
    %833 = vmatprep.subr.mxu0 0.0
    %834 = vmatpush1.msra.mxu0 %v791
    %835 = vmatprep.subr.mxu0 0.0
    %836 = vmatpush1.msra.mxu0 %v792
    %837 = vmatprep.subr.mxu0 0.0
    %838 = vmatpush1.msra.mxu0 %v793
    %839 = vmatprep.subr.mxu0 0.0
    %840 = vmatpush1.msra.mxu0 %v794
    %841 = vmatprep.subr.mxu0 0.0
    %842 = vmatpush1.msra.mxu0 %v795
    %843 = vmatprep.subr.mxu0 0.0
    %844 = vmatpush1.msra.mxu0 %v796
    %845 = vmatprep.subr.mxu0 0.0
    %846 = vmatpush1.msra.mxu0 %v797
    %847 = vmatprep.subr.mxu0 0.0
    %848 = vmatpush1.msra.mxu0 %v798
    %849 = vmatprep.subr.mxu0 0.0
    %850 = vmatpush1.msra.mxu0 %v799
    %851 = vmatprep.subr.mxu0 0.0
    %852 = vmatpush1.msra.mxu0 %v800
    %853 = vmatprep.subr.mxu0 0.0
    %854 = vmatpush1.msra.mxu0 %v801
    %855 = vmatprep.subr.mxu0 0.0
    %856 = vmatpush1.msra.mxu0 %v802
    %857 = vmatprep.subr.mxu0 0.0
    %858 = vmatpush1.msra.mxu0 %v803
    %859 = vmatprep.subr.mxu0 0.0
    %860 = vmatpush1.msra.mxu0 %v804
    %861 = vmatprep.subr.mxu0 0.0
    %862 = vmatpush1.msra.mxu0 %v805
    %863 = vmatprep.subr.mxu0 0.0
    %864 = vmatpush1.msra.mxu0 %v806
    %865 = vmatprep.subr.mxu0 0.0
    %866 = vmatpush1.msra.mxu0 %v807
    %867 = vmatprep.subr.mxu0 0.0
    %868 = vmatpush1.msra.mxu0 %v808
    %869 = vmatprep.subr.mxu0 0.0
    %870 = vmatpush1.msra.mxu0 %v809
    %871 = vmatprep.subr.mxu0 0.0
    %872 = vmatpush1.msra.mxu0 %v810
    %873 = vmatprep.subr.mxu0 0.0
    %874 = vmatpush1.msra.mxu0 %v811
    %875 = vmatprep.subr.mxu0 0.0
    %876 = vmatpush1.msra.mxu0 %v812
    %877 = vmatprep.subr.mxu0 0.0
    %878 = vmatpush1.msra.mxu0 %v813
    %879 = vmatprep.subr.mxu0 0.0
    %880 = vmatpush1.msra.mxu0 %v814
    %881 = vmatprep.subr.mxu0 0.0
    %882 = vmatpush1.msra.mxu0 %v815
    %883 = vmatprep.subr.mxu0 0.0
    %884 = vmatpush1.msra.mxu0 %v816
    %885 = vmatprep.subr.mxu0 0.0
    %886 = vmatpush1.msra.mxu0 %v817
    %887 = vmatprep.subr.mxu0 0.0
    %888 = vmatpush1.msra.mxu0 %v818
    %889 = vmatprep.subr.mxu0 0.0
    %890 = vmatpush1.msra.mxu0 %v819
    %891 = vmatprep.mubr.f32.mxu0 %v787
    %892 = vmatmul.mubr.f32.gmra.mrb[0].mxu0 %v786
    %v893 = vpop.f32.mrb[0].mxu0
    %v894 = vadd.f32 %v825, %v893
    %v895 = vpop.f32.mrb[0].mxu0
    %896 = vdwg.mxu0
    %vm897 = vcmask 33792
    %898 = vst.msk [vmem:[#allocation8] sm:$0x3] %vm897, %v894
    // Predicated region
    $region66: #{tpu_custom_call.1} parent=1 // pred_check
      _
    $region67: #{tpu_custom_call.1} parent=1 // pred_check_branch
      %900 = sbr.rel (0) target = $region69
    $region68: #{tpu_custom_call.1} parent=1 // pred_region
      %s902 = ssub.s32 32, 32
      %903 = vsyncadd [#allocation4], %s902
      %s905 = sshll.u32 [#allocation8], 4
      %s906 = int_to_ptr.vmem [resolvable:$true] %s905
      %908 = dma.vmem_to_hbm [thread:$0]  %s906, 32, %s13, [#allocation4]
    $region69: #{tpu_custom_call.1} parent=1 // pred_fallthru
      _
    // Predicated region
    $region70: #{tpu_custom_call.1} parent=1 // pred_check
      _
    $region71: #{tpu_custom_call.1} parent=1 // pred_check_branch
      %910 = sbr.rel (0) target = $region73
    $region72: #{tpu_custom_call.1} parent=1 // pred_region
      %911 = dma.done [#allocation4], 32
    $region73: #{tpu_custom_call.1} parent=1 // pred_fallthru
      _
    %912 = vsyncpa [#allocation3], 1
    %913 = vsyncpa [#allocation6], 1
    %914 = vsyncpa [#allocation4], 1

</llo_original>
